<compile_context>
chip_gen: v5e
topology: v5e:2x2
jax: 0.10.0
libtpu: 0.0.40
codegen_flags: <defaults>
</compile_context>

<pallas_src>
import jax
import jax.numpy as jnp
from jax.experimental import pallas as pl
from jax.experimental.pallas import tpu as pltpu


def _round_up(v, m):
    return (v + m - 1) // m * m


def _generator_kernel(x_ref, w1_ref, b1_ref, w2_ref, b2_ref, w3_ref, b3_ref,
                      o_ref):
    # Cast x to the MXU compute dtype in VMEM (no extra HBM pass).
    x = x_ref[...].astype(w1_ref.dtype)

    # h1 = relu(x @ W1 + b1)   -- bf16 operands, f32 accumulate on the MXU.
    h1 = jnp.dot(x, w1_ref[...], preferred_element_type=jnp.float32)
    h1 = jnp.maximum(h1 + b1_ref[...], 0.0)

    # h2 = relu(h1 @ W2 + b2)
    h2 = jnp.dot(h1.astype(w2_ref.dtype), w2_ref[...],
                 preferred_element_type=jnp.float32)
    h2 = jnp.maximum(h2 + b2_ref[...], 0.0)

    # y = (tanh(h2 @ W3 + b3) + 1) / 2
    h3 = jnp.dot(h2.astype(w3_ref.dtype), w3_ref[...],
                 preferred_element_type=jnp.float32)
    h3 = h3 + b3_ref[...]
    o_ref[...] = ((jnp.tanh(h3) + 1.0) * 0.5).astype(o_ref.dtype)


def prepare_generator_params(w1, b1, w2, b2, w3, b3,
                             compute_dtype=jnp.bfloat16):
    """One-time padding / bf16 cast of the Generator parameters.

    Call once (e.g. at init) and reuse the result across forwards so the
    per-call path only touches x.

    w1 : (100, 200)  w2 : (200, 200)  w3 : (200, dim)   (y = x @ W + b layout)
    """
    d_in, h1 = w1.shape
    _, h2 = w2.shape
    _, d_out = w3.shape

    h1_p = _round_up(h1, 128)
    h2_p = _round_up(h2, 128)
    d_out_p = _round_up(d_out, 128)

    # W1 keeps its native K=100 (full-dim block; Mosaic masks the K lanes),
    # output dims are zero-padded to 128-lane multiples for lane-dense MXU/VPU.
    w1p = jnp.zeros((d_in, h1_p), compute_dtype).at[:, :h1].set(
        w1.astype(compute_dtype))
    w2p = jnp.zeros((h1_p, h2_p), compute_dtype).at[:h1, :h2].set(
        w2.astype(compute_dtype))
    w3p = jnp.zeros((h2_p, d_out_p), compute_dtype).at[:h2, :d_out].set(
        w3.astype(compute_dtype))
    b1p = jnp.zeros((1, h1_p), jnp.float32).at[0, :h1].set(
        b1.astype(jnp.float32))
    b2p = jnp.zeros((1, h2_p), jnp.float32).at[0, :h2].set(
        b2.astype(jnp.float32))
    b3p = jnp.zeros((1, d_out_p), jnp.float32).at[0, :d_out].set(
        b3.astype(jnp.float32))
    return (w1p, b1p, w2p, b2p, w3p, b3p), d_out


def generator_forward(x, params, d_out, *, tile_b=1024,
                      out_dtype=jnp.float32, slice_output=True):
    """Fused Generator forward: (tanh(relu(relu(x@W1+b1)@W2+b2)@W3+b3)+1)/2.

    x      : (B, 100) f32
    params : output of prepare_generator_params (padded, bf16 weights)
    d_out  : logical output feature count (dim)
    tile_b : row tile; sweep 512-2048 (cap ~4096 on v7x) for large B.
    """
    w1p, b1p, w2p, b2p, w3p, b3p = params
    B, d_in = x.shape
    assert w1p.shape[0] == d_in
    h1_p = w1p.shape[1]
    h2_p = w2p.shape[1]
    d_out_p = w3p.shape[1]

    # 16-row granularity (bf16 sublane packing); never exceed the batch.
    tile_b = max(16, min(tile_b, _round_up(B, 16)))
    B_p = _round_up(B, tile_b)
    if B_p != B:
        x = jnp.zeros((B_p, d_in), x.dtype).at[:B].set(x)

    grid = (B_p // tile_b,)

    flops = 2 * B_p * (d_in * h1_p + h1_p * h2_p + h2_p * d_out_p)
    bytes_accessed = (
        B_p * d_in * x.dtype.itemsize
        + (w1p.size + w2p.size + w3p.size) * w1p.dtype.itemsize
        + (b1p.size + b2p.size + b3p.size) * 4
        + B_p * d_out_p * jnp.dtype(out_dtype).itemsize)

    out_p = pl.pallas_call(
        _generator_kernel,
        out_shape=jax.ShapeDtypeStruct((B_p, d_out_p), out_dtype),
        grid=grid,
        in_specs=[
            pl.BlockSpec((tile_b, d_in), lambda i: (i, 0)),   # x row tile (f32, K=100)
            pl.BlockSpec((d_in, h1_p), lambda i: (0, 0)),     # W1 (VMEM-resident)
            pl.BlockSpec((1, h1_p), lambda i: (0, 0)),        # b1
            pl.BlockSpec((h1_p, h2_p), lambda i: (0, 0)),     # W2
            pl.BlockSpec((1, h2_p), lambda i: (0, 0)),        # b2
            pl.BlockSpec((h2_p, d_out_p), lambda i: (0, 0)),  # W3
            pl.BlockSpec((1, d_out_p), lambda i: (0, 0)),     # b3
        ],
        out_specs=pl.BlockSpec((tile_b, d_out_p), lambda i: (i, 0)),
        compiler_params=pltpu.CompilerParams(
            dimension_semantics=("parallel",)),
        cost_estimate=pl.CostEstimate(
            flops=flops,
            transcendentals=B_p * d_out_p,   # tanh
            bytes_accessed=bytes_accessed),
    )(x, w1p, b1p, w2p, b2p, w3p, b3p)

    if not slice_output:
        return out_p          # padded (B_p, d_out_p) layout for fused consumers
    if B_p == B and d_out_p == d_out:
        return out_p
    return out_p[:B, :d_out]


def reference_forward(x, w1, b1, w2, b2, w3, b3):
    # Pure-JAX reference following the same bf16-operand / f32-accumulate path.
    cdt = jnp.bfloat16
    h = jnp.dot(x.astype(cdt), w1.astype(cdt),
                preferred_element_type=jnp.float32) + b1
    h = jnp.maximum(h, 0.0)
    h = jnp.dot(h.astype(cdt), w2.astype(cdt),
                preferred_element_type=jnp.float32) + b2
    h = jnp.maximum(h, 0.0)
    h = jnp.dot(h.astype(cdt), w3.astype(cdt),
                preferred_element_type=jnp.float32) + b3
    return (jnp.tanh(h) + 1.0) * 0.5


if __name__ == "__main__":
    # Generator(dim=64); fc1 input is fixed at 100 by the module.
    batch = 16
    noise_dim = 100
    hidden_dim = 200
    dim = 64

    key = jax.random.PRNGKey(0)
    kx, k1, k2, k3, k4, k5, k6 = jax.random.split(key, 7)

    x = jax.random.normal(kx, (batch, noise_dim), dtype=jnp.float32)

    def init_linear(kw, kb, fan_in, fan_out):
        lim = 1.0 / (fan_in ** 0.5)
        w = jax.random.uniform(kw, (fan_in, fan_out), jnp.float32, -lim, lim)
        b = jax.random.uniform(kb, (fan_out,), jnp.float32, -lim, lim)
        return w, b

    w1, b1 = init_linear(k1, k2, noise_dim, hidden_dim)
    w2, b2 = init_linear(k3, k4, hidden_dim, hidden_dim)
    w3, b3 = init_linear(k5, k6, hidden_dim, dim)

    # TODO(synk): Generator.generate_fake_features (scipy.sparse coo_matrix +
    # host-side numpy indexing) is not part of forward() and is not translated.

    # Hoisted, one-time parameter padding / bf16 cast (reused across calls).
    params, d_out = prepare_generator_params(w1, b1, w2, b2, w3, b3)
    params = jax.block_until_ready(params)

    out = generator_forward(x, params, d_out)
    out = jax.block_until_ready(out)

    ref = reference_forward(x, w1, b1, w2, b2, w3, b3)
    assert out.shape == (batch, dim)
    max_err = float(jnp.max(jnp.abs(out - ref)))
    assert jnp.allclose(out, ref, atol=2e-3, rtol=2e-3), (
        f"mismatch vs reference, max abs err = {max_err}")

    print("KERNEL_OK")
</pallas_src>

<mosaic_0001>
module attributes {stable_mosaic.version = 11 : i64} {
  func.func @_generator_kernel(%arg0: i32, %arg1: memref<16x100xf32, #tpu.memory_space<vmem>>, %arg2: memref<100x256xbf16, #tpu.memory_space<vmem>>, %arg3: memref<1x256xf32, #tpu.memory_space<vmem>>, %arg4: memref<256x256xbf16, #tpu.memory_space<vmem>>, %arg5: memref<1x256xf32, #tpu.memory_space<vmem>>, %arg6: memref<256x128xbf16, #tpu.memory_space<vmem>>, %arg7: memref<1x128xf32, #tpu.memory_space<vmem>>, %arg8: memref<16x128xf32, #tpu.memory_space<vmem>>) attributes {dimension_semantics = [#tpu.dimension_semantics<parallel>], iteration_bounds = array<i64: 1>, scalar_prefetch = 0 : i64, scratch_operands = 0 : i64, tpu.core_type = #tpu.core_type<tc>, window_params = [{transform_indices = @transform_0, window_bounds = array<i64: 16, 100>}, {pipeline_mode = #tpu.pipeline_mode<synchronous>, transform_indices = @transform_1, window_bounds = array<i64: 100, 256>}, {pipeline_mode = #tpu.pipeline_mode<synchronous>, transform_indices = @transform_2, window_bounds = array<i64: 1, 256>}, {pipeline_mode = #tpu.pipeline_mode<synchronous>, transform_indices = @transform_3, window_bounds = array<i64: 256, 256>}, {pipeline_mode = #tpu.pipeline_mode<synchronous>, transform_indices = @transform_4, window_bounds = array<i64: 1, 256>}, {pipeline_mode = #tpu.pipeline_mode<synchronous>, transform_indices = @transform_5, window_bounds = array<i64: 256, 128>}, {pipeline_mode = #tpu.pipeline_mode<synchronous>, transform_indices = @transform_6, window_bounds = array<i64: 1, 128>}, {transform_indices = @transform_7, window_bounds = array<i64: 16, 128>}]} {
    %c0 = arith.constant 0 : index
    %c0_0 = arith.constant 0 : index
    %0 = vector.load %arg1[%c0, %c0_0] : memref<16x100xf32, #tpu.memory_space<vmem>>, vector<16x100xf32>
    %1 = arith.truncf %0 : vector<16x100xf32> to vector<16x100xbf16>
    %c0_1 = arith.constant 0 : index
    %c0_2 = arith.constant 0 : index
    %2 = vector.load %arg2[%c0_1, %c0_2] : memref<100x256xbf16, #tpu.memory_space<vmem>>, vector<100x256xbf16>
    %cst = arith.constant dense<0.000000e+00> : vector<16x256xf32>
    %3 = tpu.matmul %1, %2, %cst {dimension_numbers = #tpu.dot_dimension_numbers<[1], [0], [0], [1], [0, 0, 1, 1], [], []>} : vector<16x100xbf16>, vector<100x256xbf16>, vector<16x256xf32> -> vector<16x256xf32>
    %c0_3 = arith.constant 0 : index
    %c0_4 = arith.constant 0 : index
    %4 = vector.load %arg3[%c0_3, %c0_4] : memref<1x256xf32, #tpu.memory_space<vmem>>, vector<1x256xf32>
    %5 = vector.broadcast %4 : vector<1x256xf32> to vector<16x256xf32>
    %6 = arith.addf %3, %5 : vector<16x256xf32>
    %cst_5 = arith.constant 0.000000e+00 : f32
    %7 = vector.broadcast %cst_5 : f32 to vector<16x256xf32>
    %8 = arith.maximumf %6, %7 : vector<16x256xf32>
    %9 = arith.truncf %8 : vector<16x256xf32> to vector<16x256xbf16>
    %c0_6 = arith.constant 0 : index
    %c0_7 = arith.constant 0 : index
    %10 = vector.load %arg4[%c0_6, %c0_7] : memref<256x256xbf16, #tpu.memory_space<vmem>>, vector<256x256xbf16>
    %cst_8 = arith.constant dense<0.000000e+00> : vector<16x256xf32>
    %11 = tpu.matmul %9, %10, %cst_8 {dimension_numbers = #tpu.dot_dimension_numbers<[1], [0], [0], [1], [0, 0, 1, 1], [], []>} : vector<16x256xbf16>, vector<256x256xbf16>, vector<16x256xf32> -> vector<16x256xf32>
    %c0_9 = arith.constant 0 : index
    %c0_10 = arith.constant 0 : index
    %12 = vector.load %arg5[%c0_9, %c0_10] : memref<1x256xf32, #tpu.memory_space<vmem>>, vector<1x256xf32>
    %13 = vector.broadcast %12 : vector<1x256xf32> to vector<16x256xf32>
    %14 = arith.addf %11, %13 : vector<16x256xf32>
    %cst_11 = arith.constant 0.000000e+00 : f32
    %15 = vector.broadcast %cst_11 : f32 to vector<16x256xf32>
    %16 = arith.maximumf %14, %15 : vector<16x256xf32>
    %17 = arith.truncf %16 : vector<16x256xf32> to vector<16x256xbf16>
    %c0_12 = arith.constant 0 : index
    %c0_13 = arith.constant 0 : index
    %18 = vector.load %arg6[%c0_12, %c0_13] : memref<256x128xbf16, #tpu.memory_space<vmem>>, vector<256x128xbf16>
    %cst_14 = arith.constant dense<0.000000e+00> : vector<16x128xf32>
    %19 = tpu.matmul %17, %18, %cst_14 {dimension_numbers = #tpu.dot_dimension_numbers<[1], [0], [0], [1], [0, 0, 1, 1], [], []>} : vector<16x256xbf16>, vector<256x128xbf16>, vector<16x128xf32> -> vector<16x128xf32>
    %c0_15 = arith.constant 0 : index
    %c0_16 = arith.constant 0 : index
    %20 = vector.load %arg7[%c0_15, %c0_16] : memref<1x128xf32, #tpu.memory_space<vmem>>, vector<1x128xf32>
    %21 = vector.broadcast %20 : vector<1x128xf32> to vector<16x128xf32>
    %22 = arith.addf %19, %21 : vector<16x128xf32>
    %23 = math.tanh %22 : vector<16x128xf32>
    %cst_17 = arith.constant 1.000000e+00 : f32
    %24 = vector.broadcast %cst_17 : f32 to vector<16x128xf32>
    %25 = arith.addf %23, %24 : vector<16x128xf32>
    %cst_18 = arith.constant 5.000000e-01 : f32
    %26 = vector.broadcast %cst_18 : f32 to vector<16x128xf32>
    %27 = arith.mulf %25, %26 : vector<16x128xf32>
    %c0_19 = arith.constant 0 : index
    %c0_20 = arith.constant 0 : index
    %28 = vector.load %arg8[%c0_19, %c0_20] : memref<16x128xf32, #tpu.memory_space<vmem>>, vector<16x128xf32>
    tpu.vector_store %arg8[%c0_19, %c0_20], %27 {strides = array<i32>} : memref<16x128xf32, #tpu.memory_space<vmem>>, vector<16x128xf32>,
    return
  }
  func.func @transform_0(%arg0: i32) -> (i32, i32) {
    %c0_i32 = arith.constant 0 : i32
    %c0_i32_0 = arith.constant 0 : i32
    return %arg0, %c0_i32 : i32, i32
  }
  func.func @transform_1(%arg0: i32) -> (i32, i32) {
    %c0_i32 = arith.constant 0 : i32
    %c0_i32_0 = arith.constant 0 : i32
    %c0_i32_1 = arith.constant 0 : i32
    return %c0_i32, %c0_i32_0 : i32, i32
  }
  func.func @transform_2(%arg0: i32) -> (i32, i32) {
    %c0_i32 = arith.constant 0 : i32
    %c0_i32_0 = arith.constant 0 : i32
    %c0_i32_1 = arith.constant 0 : i32
    return %c0_i32, %c0_i32_0 : i32, i32
  }
  func.func @transform_3(%arg0: i32) -> (i32, i32) {
    %c0_i32 = arith.constant 0 : i32
    %c0_i32_0 = arith.constant 0 : i32
    %c0_i32_1 = arith.constant 0 : i32
    return %c0_i32, %c0_i32_0 : i32, i32
  }
  func.func @transform_4(%arg0: i32) -> (i32, i32) {
    %c0_i32 = arith.constant 0 : i32
    %c0_i32_0 = arith.constant 0 : i32
    %c0_i32_1 = arith.constant 0 : i32
    return %c0_i32, %c0_i32_0 : i32, i32
  }
  func.func @transform_5(%arg0: i32) -> (i32, i32) {
    %c0_i32 = arith.constant 0 : i32
    %c0_i32_0 = arith.constant 0 : i32
    %c0_i32_1 = arith.constant 0 : i32
    return %c0_i32, %c0_i32_0 : i32, i32
  }
  func.func @transform_6(%arg0: i32) -> (i32, i32) {
    %c0_i32 = arith.constant 0 : i32
    %c0_i32_0 = arith.constant 0 : i32
    %c0_i32_1 = arith.constant 0 : i32
    return %c0_i32, %c0_i32_0 : i32, i32
  }
  func.func @transform_7(%arg0: i32) -> (i32, i32) {
    %c0_i32 = arith.constant 0 : i32
    %c0_i32_0 = arith.constant 0 : i32
    return %arg0, %c0_i32 : i32, i32
  }
}

</mosaic_0001>

<llo_original>
// kernel: tpu_custom_call.1
$region0: #{tpu_custom_call.1}
  #allocation0 [shape = 'u32[]', space=smem, size = 0x4, offset = 0x4, fixed_abs, tag = 'smem constant byte address 0x4 - core index']
  #allocation1 [shape = 'u32[72,128]{1,0:T(1,128)}', space=vmem, size = 0x9000, scoped, tag = 'internal scratch']
  %s0 = inlined_call_operand.hbm [shape: f32[16,100], index: 0, kind: input, shape index: {}]
  %s1 = inlined_call_operand.hbm [shape: bf16[100,256], index: 1, kind: input, shape index: {}]
  %s2 = inlined_call_operand.hbm [shape: f32[1,256], index: 2, kind: input, shape index: {}]
  %s3 = inlined_call_operand.hbm [shape: bf16[256,256], index: 3, kind: input, shape index: {}]
  %s4 = inlined_call_operand.vmem [shape: f32[1,256], index: 4, kind: input, shape index: {}]
  %s5 = inlined_call_operand.hbm [shape: bf16[256,128], index: 5, kind: input, shape index: {}]
  %s6 = inlined_call_operand.vmem [shape: f32[1,128], index: 6, kind: input, shape index: {}]
  %s7 = inlined_call_operand.hbm [shape: f32[16,128], index: 7, kind: output, shape index: {}]
  %s8 = sld [smem:[#allocation0]]
  $region58: #{tpu_custom_call.1} parent=0
    _
  %s10 = ssub.s32 1, %s8
  %s11 = scalar_select 0, %s10, %s8
  $region1: #{tpu_custom_call.1} parent=0
    #allocation2 [shape = 'u8[8192]{0}', space=vmem, size = 0x2000, scoped, tag = 'input window, operand 0, single buffered']
    #allocation3 [shape = 's32[1]{0}', space=sflag, size = 0x4, scoped, tag = 'scoped memory for tpu_custom_call.1']
    #allocation4 [shape = 's32[1]{0}', space=sflag, size = 0x4, scoped, tag = 'scoped memory for tpu_custom_call.1']
    #allocation5 [shape = 'u8[53248]{0}', space=vmem, size = 0xd000, scoped, tag = 'input window, operand 1, single buffered']
    #allocation6 [shape = 's32[1]{0}', space=sflag, size = 0x4, scoped, tag = 'scoped memory for tpu_custom_call.1']
    #allocation7 [shape = 'u8[1024]{0}', space=vmem, size = 0x400, scoped, tag = 'input window, operand 2, single buffered']
    #allocation8 [shape = 'u8[131072]{0}', space=vmem, size = 0x20000, scoped, tag = 'input window, operand 3, single buffered']
    #allocation9 [shape = 's32[1]{0}', space=sflag, size = 0x4, scoped, tag = 'scoped memory for tpu_custom_call.1']
    #allocation10 [shape = 'u8[65536]{0}', space=vmem, size = 0x10000, scoped, tag = 'input window, operand 5, single buffered']
    #allocation11 [shape = 'u8[8192]{0}', space=vmem, size = 0x2000, scoped, tag = 'output window, operand 0, single buffered']
    %12 = vsyncpa [#allocation3], 0
    %13 = vsyncpa [#allocation6], 0
    %14 = vsyncpa [#allocation9], 0
    %15 = vsyncpa [#allocation4], 0
    // Predicated region
    $region2: #{tpu_custom_call.1} parent=1 // pred_check
      _
    $region3: #{tpu_custom_call.1} parent=1 // pred_check_branch
      %17 = sbr.rel (0) target = $region5
    $region4: #{tpu_custom_call.1} parent=1 // pred_region
      %19 = vsyncadd [#allocation3], 0
      %s20 = sshll.u32 %s0, 4
      %s21 = int_to_ptr.hbm [resolvable:$true] %s20
      %s22 = sshll.u32 [#allocation2], 4
      %s23 = int_to_ptr.vmem [resolvable:$true] %s22
      %28 = dma.hbm_to_vmem [thread:$0]  %s21, 256, %s23, [#allocation3], 128, 128, 8
    $region5: #{tpu_custom_call.1} parent=1 // pred_fallthru
      _
    // Predicated region
    $region6: #{tpu_custom_call.1} parent=1 // pred_check
      _
    $region7: #{tpu_custom_call.1} parent=1 // pred_check_branch
      %30 = sbr.rel (0) target = $region9
    $region8: #{tpu_custom_call.1} parent=1 // pred_region
      %32 = vsyncadd [#allocation6], 0
      %s33 = sshll.u32 %s1, 4
      %s34 = int_to_ptr.hbm [resolvable:$true] %s33
      %s35 = sshll.u32 [#allocation5], 4
      %s36 = int_to_ptr.vmem [resolvable:$true] %s35
      %41 = dma.hbm_to_vmem [thread:$0]  %s34, 1664, %s36, [#allocation6], 128, 128, 8
    $region9: #{tpu_custom_call.1} parent=1 // pred_fallthru
      _
    // Predicated region
    $region10: #{tpu_custom_call.1} parent=1 // pred_check
      _
    $region11: #{tpu_custom_call.1} parent=1 // pred_check_branch
      %43 = sbr.rel (0) target = $region13
    $region12: #{tpu_custom_call.1} parent=1 // pred_region
      %45 = vsyncadd [#allocation6], 0
      %s47 = sshll.u32 %s2, 4
      %s48 = int_to_ptr.hbm [resolvable:$true] %s47
      %s49 = sshll.u32 [#allocation7], 4
      %s50 = int_to_ptr.vmem [resolvable:$true] %s49
      %52 = dma.hbm_to_vmem [thread:$0]  %s48, 32, %s50, [#allocation6]
    $region13: #{tpu_custom_call.1} parent=1 // pred_fallthru
      _
    // Predicated region
    $region14: #{tpu_custom_call.1} parent=1 // pred_check
      _
    $region15: #{tpu_custom_call.1} parent=1 // pred_check_branch
      %54 = sbr.rel (0) target = $region17
    $region16: #{tpu_custom_call.1} parent=1 // pred_region
      %56 = vsyncadd [#allocation9], 0
      %s57 = sshll.u32 %s3, 4
      %s58 = int_to_ptr.hbm [resolvable:$true] %s57
      %s59 = sshll.u32 [#allocation8], 4
      %s60 = int_to_ptr.vmem [resolvable:$true] %s59
      %65 = dma.hbm_to_vmem [thread:$0]  %s58, 4096, %s60, [#allocation9], 128, 128, 8
    $region17: #{tpu_custom_call.1} parent=1 // pred_fallthru
      _
    // Predicated region
    $region18: #{tpu_custom_call.1} parent=1 // pred_check
      _
    $region19: #{tpu_custom_call.1} parent=1 // pred_check_branch
      %67 = sbr.rel (0) target = $region21
    $region20: #{tpu_custom_call.1} parent=1 // pred_region
      _
    $region21: #{tpu_custom_call.1} parent=1 // pred_fallthru
      _
    // Predicated region
    $region22: #{tpu_custom_call.1} parent=1 // pred_check
      _
    $region23: #{tpu_custom_call.1} parent=1 // pred_check_branch
      %69 = sbr.rel (0) target = $region25
    $region24: #{tpu_custom_call.1} parent=1 // pred_region
      %71 = vsyncadd [#allocation9], 0
      %s72 = sshll.u32 %s5, 4
      %s73 = int_to_ptr.hbm [resolvable:$true] %s72
      %s74 = sshll.u32 [#allocation10], 4
      %s75 = int_to_ptr.vmem [resolvable:$true] %s74
      %80 = dma.hbm_to_vmem [thread:$0]  %s73, 2048, %s75, [#allocation9], 64, 64, 4
    $region25: #{tpu_custom_call.1} parent=1 // pred_fallthru
      _
    // Predicated region
    $region26: #{tpu_custom_call.1} parent=1 // pred_check
      _
    $region27: #{tpu_custom_call.1} parent=1 // pred_check_branch
      %82 = sbr.rel (0) target = $region29
    $region28: #{tpu_custom_call.1} parent=1 // pred_region
      _
    $region29: #{tpu_custom_call.1} parent=1 // pred_fallthru
      _
    // Predicated region
    $region30: #{tpu_custom_call.1} parent=1 // pred_check
      _
    $region31: #{tpu_custom_call.1} parent=1 // pred_check_branch
      %84 = sbr.rel (0) target = $region33
    $region32: #{tpu_custom_call.1} parent=1 // pred_region
      %86 = dma.done [#allocation3], 256
    $region33: #{tpu_custom_call.1} parent=1 // pred_fallthru
      _
    // Predicated region
    $region34: #{tpu_custom_call.1} parent=1 // pred_check
      _
    $region35: #{tpu_custom_call.1} parent=1 // pred_check_branch
      %88 = sbr.rel (0) target = $region37
    $region36: #{tpu_custom_call.1} parent=1 // pred_region
      %90 = dma.done [#allocation6], 1664
    $region37: #{tpu_custom_call.1} parent=1 // pred_fallthru
      _
    // Predicated region
    $region38: #{tpu_custom_call.1} parent=1 // pred_check
      _
    $region39: #{tpu_custom_call.1} parent=1 // pred_check_branch
      %92 = sbr.rel (0) target = $region41
    $region40: #{tpu_custom_call.1} parent=1 // pred_region
      %94 = dma.done [#allocation6], 32
    $region41: #{tpu_custom_call.1} parent=1 // pred_fallthru
      _
    // Predicated region
    $region42: #{tpu_custom_call.1} parent=1 // pred_check
      _
    $region43: #{tpu_custom_call.1} parent=1 // pred_check_branch
      %96 = sbr.rel (0) target = $region45
    $region44: #{tpu_custom_call.1} parent=1 // pred_region
      %98 = dma.done [#allocation9], 4096
    $region45: #{tpu_custom_call.1} parent=1 // pred_fallthru
      _
    // Predicated region
    $region46: #{tpu_custom_call.1} parent=1 // pred_check
      _
    $region47: #{tpu_custom_call.1} parent=1 // pred_check_branch
      %100 = sbr.rel (0) target = $region49
    $region48: #{tpu_custom_call.1} parent=1 // pred_region
      %102 = dma.done [#allocation9], 2048
    $region49: #{tpu_custom_call.1} parent=1 // pred_fallthru
      _
    %v104 = vld [vmem:[#allocation2] sm:$0xff]
    %v105 = vld [vmem:[#allocation2 + $0x8] sm:$0xff]
    %v106 = vpack.c.bf16 %v105, %v104
    %v107 = vld [vmem:[#allocation5] sm:$0xff]
    %v108 = vld [vmem:[#allocation5 + $0x8] sm:$0xff]
    %v109 = vld [vmem:[#allocation5 + $0x10] sm:$0xff]
    %v110 = vld [vmem:[#allocation5 + $0x18] sm:$0xff]
    %v111 = vld [vmem:[#allocation5 + $0x20] sm:$0xff]
    %v112 = vld [vmem:[#allocation5 + $0x28] sm:$0xff]
    %v113 = vld [vmem:[#allocation5 + $0x30] sm:$0xff]
    %v114 = vld [vmem:[#allocation5 + $0x38] sm:$0xff]
    %v115 = vld [vmem:[#allocation5 + $0x40] sm:$0xff]
    %v116 = vld [vmem:[#allocation5 + $0x48] sm:$0xff]
    %v117 = vld [vmem:[#allocation5 + $0x50] sm:$0xff]
    %v118 = vld [vmem:[#allocation5 + $0x58] sm:$0xff]
    %v119 = vld [vmem:[#allocation5 + $0x60] sm:$0x33]
    %v120 = vld [vmem:[#allocation7] sm:$0x3]
    %v122 = vperm.slane %v120, 0
    %v123 = vperm.slane %v120, 1
    %v139 = vunpack.c.l.b16 %v107
    %v140 = vunpack.c.h.b16 %v107
    %v141 = vunpack.c.l.b16 %v108
    %v142 = vunpack.c.h.b16 %v108
    %v143 = vunpack.c.l.b16 %v109
    %v144 = vunpack.c.h.b16 %v109
    %v145 = vunpack.c.l.b16 %v110
    %v146 = vunpack.c.h.b16 %v110
    %v147 = vunpack.c.l.b16 %v111
    %v148 = vunpack.c.h.b16 %v111
    %v149 = vunpack.c.l.b16 %v112
    %v150 = vunpack.c.h.b16 %v112
    %v151 = vunpack.c.l.b16 %v113
    %v152 = vunpack.c.h.b16 %v113
    %v153 = vunpack.c.l.b16 %v114
    %v154 = vunpack.c.h.b16 %v114
    %v155 = vunpack.c.l.b16 %v115
    %v156 = vunpack.c.h.b16 %v115
    %v157 = vunpack.c.l.b16 %v116
    %v158 = vunpack.c.h.b16 %v116
    %v159 = vunpack.c.l.b16 %v117
    %v160 = vunpack.c.h.b16 %v117
    %v161 = vunpack.c.l.b16 %v118
    %v162 = vunpack.c.h.b16 %v118
    %v163 = vunpack.c.l.b16 %v119
    %v164 = vunpack.c.h.b16 %v119
    %v165 = vpack.c.b16 %v141, %v139
    %v166 = vpack.c.b16 %v142, %v140
    %v167 = vpack.c.b16 %v145, %v143
    %v168 = vpack.c.b16 %v146, %v144
    %v169 = vpack.c.b16 %v149, %v147
    %v170 = vpack.c.b16 %v150, %v148
    %v171 = vpack.c.b16 %v153, %v151
    %v172 = vpack.c.b16 %v154, %v152
    %v173 = vpack.c.b16 %v157, %v155
    %v174 = vpack.c.b16 %v158, %v156
    %v175 = vpack.c.b16 %v161, %v159
    %v176 = vpack.c.b16 %v162, %v160
    %v177 = vpack.c.b16 %v163, %v163
    %v178 = vpack.c.b16 %v164, %v164
    %vm191 = vcmask 818176
    %v193 = vsel %vm191, %v106, 0
    %vm195 = vcmask 1041408
    %v197 = vsel %vm195, %v177, 0
    %v200 = vsel %vm195, %v178, 0
    %202 = vmatpush.bf16.msra.mxu0 0
    %203 = vmatpush.bf16.msra.mxu0 %v197
    %204 = vmatpush.bf16.msra.mxu0 %v175
    %205 = vmatpush.bf16.msra.mxu0 %v173
    %206 = vmatpush.bf16.msra.mxu0 %v171
    %207 = vmatpush.bf16.msra.mxu0 %v169
    %208 = vmatpush.bf16.msra.mxu0 %v167
    %209 = vmatpush.bf16.msra.mxu0 %v165
    %210 = vmatmul.bf16.gmra.mxu0 %v193
    %v211 = vpop.f32.mrf.mxu0
    %v212 = vadd.f32 %v122, %v211
    %v213 = vpop.f32.mrf.mxu0
    %v214 = vadd.f32 %v122, %v213
    %215 = vdwg.mxu0
    %216 = vmatpush.bf16.msra.mxu0 0
    %217 = vmatpush.bf16.msra.mxu0 %v200
    %218 = vmatpush.bf16.msra.mxu0 %v176
    %219 = vmatpush.bf16.msra.mxu0 %v174
    %220 = vmatpush.bf16.msra.mxu0 %v172
    %221 = vmatpush.bf16.msra.mxu0 %v170
    %222 = vmatpush.bf16.msra.mxu0 %v168
    %223 = vmatpush.bf16.msra.mxu0 %v166
    %224 = vmatmul.bf16.gmra.mxu0 %v193
    %v225 = vpop.f32.mrf.mxu0
    %v226 = vadd.f32 %v123, %v225
    %v227 = vpop.f32.mrf.mxu0
    %v228 = vadd.f32 %v123, %v227
    %229 = vdwg.mxu0
    %v230 = vmax.f32 %v212, 0.0
    %v231 = vmax.f32 %v226, 0.0
    %v232 = vmax.f32 %v214, 0.0
    %v233 = vmax.f32 %v228, 0.0
    %v234 = vpack.c.bf16 %v232, %v230
    %v235 = vpack.c.bf16 %v233, %v231
    %v236 = vld [vmem:[#allocation8] sm:$0xff]
    %v237 = vld [vmem:[#allocation8 + $0x8] sm:$0xff]
    %v238 = vld [vmem:[#allocation8 + $0x10] sm:$0xff]
    %v239 = vld [vmem:[#allocation8 + $0x18] sm:$0xff]
    %v240 = vld [vmem:[#allocation8 + $0x20] sm:$0xff]
    %v241 = vld [vmem:[#allocation8 + $0x28] sm:$0xff]
    %v242 = vld [vmem:[#allocation8 + $0x30] sm:$0xff]
    %v243 = vld [vmem:[#allocation8 + $0x38] sm:$0xff]
    %v244 = vld [vmem:[#allocation8 + $0x40] sm:$0xff]
    %v245 = vld [vmem:[#allocation8 + $0x48] sm:$0xff]
    %v246 = vld [vmem:[#allocation8 + $0x50] sm:$0xff]
    %v247 = vld [vmem:[#allocation8 + $0x58] sm:$0xff]
    %v248 = vld [vmem:[#allocation8 + $0x60] sm:$0xff]
    %v249 = vld [vmem:[#allocation8 + $0x68] sm:$0xff]
    %v250 = vld [vmem:[#allocation8 + $0x70] sm:$0xff]
    %v251 = vld [vmem:[#allocation8 + $0x78] sm:$0xff]
    %v252 = vld [vmem:[#allocation8 + $0x80] sm:$0xff]
    %v253 = vld [vmem:[#allocation8 + $0x88] sm:$0xff]
    %v254 = vld [vmem:[#allocation8 + $0x90] sm:$0xff]
    %v255 = vld [vmem:[#allocation8 + $0x98] sm:$0xff]
    %v256 = vld [vmem:[#allocation8 + $0xa0] sm:$0xff]
    %v257 = vld [vmem:[#allocation8 + $0xa8] sm:$0xff]
    %v258 = vld [vmem:[#allocation8 + $0xb0] sm:$0xff]
    %v259 = vld [vmem:[#allocation8 + $0xb8] sm:$0xff]
    %v260 = vld [vmem:[#allocation8 + $0xc0] sm:$0xff]
    %v261 = vld [vmem:[#allocation8 + $0xc8] sm:$0xff]
    %v262 = vld [vmem:[#allocation8 + $0xd0] sm:$0xff]
    %v263 = vld [vmem:[#allocation8 + $0xd8] sm:$0xff]
    %v264 = vld [vmem:[#allocation8 + $0xe0] sm:$0xff]
    %v265 = vld [vmem:[#allocation8 + $0xe8] sm:$0xff]
    %v266 = vld [vmem:[#allocation8 + $0xf0] sm:$0xff]
    %v267 = vld [vmem:[#allocation8 + $0xf8] sm:$0xff]
    %v268 = vld [vmem:[%s4] sm:$0x3]
    %v270 = vperm.slane %v268, 0
    %v271 = vperm.slane %v268, 1
    %v306 = vunpack.c.l.b16 %v236
    %v307 = vunpack.c.h.b16 %v236
    %v308 = vunpack.c.l.b16 %v237
    %v309 = vunpack.c.h.b16 %v237
    %v310 = vunpack.c.l.b16 %v238
    %v311 = vunpack.c.h.b16 %v238
    %v312 = vunpack.c.l.b16 %v239
    %v313 = vunpack.c.h.b16 %v239
    %v314 = vunpack.c.l.b16 %v240
    %v315 = vunpack.c.h.b16 %v240
    %v316 = vunpack.c.l.b16 %v241
    %v317 = vunpack.c.h.b16 %v241
    %v318 = vunpack.c.l.b16 %v242
    %v319 = vunpack.c.h.b16 %v242
    %v320 = vunpack.c.l.b16 %v243
    %v321 = vunpack.c.h.b16 %v243
    %v322 = vunpack.c.l.b16 %v244
    %v323 = vunpack.c.h.b16 %v244
    %v324 = vunpack.c.l.b16 %v245
    %v325 = vunpack.c.h.b16 %v245
    %v326 = vunpack.c.l.b16 %v246
    %v327 = vunpack.c.h.b16 %v246
    %v328 = vunpack.c.l.b16 %v247
    %v329 = vunpack.c.h.b16 %v247
    %v330 = vunpack.c.l.b16 %v248
    %v331 = vunpack.c.h.b16 %v248
    %v332 = vunpack.c.l.b16 %v249
    %v333 = vunpack.c.h.b16 %v249
    %v334 = vunpack.c.l.b16 %v250
    %v335 = vunpack.c.h.b16 %v250
    %v336 = vunpack.c.l.b16 %v251
    %v337 = vunpack.c.h.b16 %v251
    %v338 = vunpack.c.l.b16 %v252
    %v339 = vunpack.c.h.b16 %v252
    %v340 = vunpack.c.l.b16 %v253
    %v341 = vunpack.c.h.b16 %v253
    %v342 = vunpack.c.l.b16 %v254
    %v343 = vunpack.c.h.b16 %v254
    %v344 = vunpack.c.l.b16 %v255
    %v345 = vunpack.c.h.b16 %v255
    %v346 = vunpack.c.l.b16 %v256
    %v347 = vunpack.c.h.b16 %v256
    %v348 = vunpack.c.l.b16 %v257
    %v349 = vunpack.c.h.b16 %v257
    %v350 = vunpack.c.l.b16 %v258
    %v351 = vunpack.c.h.b16 %v258
    %v352 = vunpack.c.l.b16 %v259
    %v353 = vunpack.c.h.b16 %v259
    %v354 = vunpack.c.l.b16 %v260
    %v355 = vunpack.c.h.b16 %v260
    %v356 = vunpack.c.l.b16 %v261
    %v357 = vunpack.c.h.b16 %v261
    %v358 = vunpack.c.l.b16 %v262
    %v359 = vunpack.c.h.b16 %v262
    %v360 = vunpack.c.l.b16 %v263
    %v361 = vunpack.c.h.b16 %v263
    %v362 = vunpack.c.l.b16 %v264
    %v363 = vunpack.c.h.b16 %v264
    %v364 = vunpack.c.l.b16 %v265
    %v365 = vunpack.c.h.b16 %v265
    %v366 = vunpack.c.l.b16 %v266
    %v367 = vunpack.c.h.b16 %v266
    %v368 = vunpack.c.l.b16 %v267
    %v369 = vunpack.c.h.b16 %v267
    %v370 = vpack.c.b16 %v308, %v306
    %v371 = vpack.c.b16 %v309, %v307
    %v372 = vpack.c.b16 %v312, %v310
    %v373 = vpack.c.b16 %v313, %v311
    %v374 = vpack.c.b16 %v316, %v314
    %v375 = vpack.c.b16 %v317, %v315
    %v376 = vpack.c.b16 %v320, %v318
    %v377 = vpack.c.b16 %v321, %v319
    %v378 = vpack.c.b16 %v324, %v322
    %v379 = vpack.c.b16 %v325, %v323
    %v380 = vpack.c.b16 %v328, %v326
    %v381 = vpack.c.b16 %v329, %v327
    %v382 = vpack.c.b16 %v332, %v330
    %v383 = vpack.c.b16 %v333, %v331
    %v384 = vpack.c.b16 %v336, %v334
    %v385 = vpack.c.b16 %v337, %v335
    %v386 = vpack.c.b16 %v340, %v338
    %v387 = vpack.c.b16 %v341, %v339
    %v388 = vpack.c.b16 %v344, %v342
    %v389 = vpack.c.b16 %v345, %v343
    %v390 = vpack.c.b16 %v348, %v346
    %v391 = vpack.c.b16 %v349, %v347
    %v392 = vpack.c.b16 %v352, %v350
    %v393 = vpack.c.b16 %v353, %v351
    %v394 = vpack.c.b16 %v356, %v354
    %v395 = vpack.c.b16 %v357, %v355
    %v396 = vpack.c.b16 %v360, %v358
    %v397 = vpack.c.b16 %v361, %v359
    %v398 = vpack.c.b16 %v364, %v362
    %v399 = vpack.c.b16 %v365, %v363
    %v400 = vpack.c.b16 %v368, %v366
    %v401 = vpack.c.b16 %v369, %v367
    %434 = vmatpush.bf16.msra.mxu0 %v384
    %435 = vmatpush.bf16.msra.mxu0 %v382
    %436 = vmatpush.bf16.msra.mxu0 %v380
    %437 = vmatpush.bf16.msra.mxu0 %v378
    %438 = vmatpush.bf16.msra.mxu0 %v376
    %439 = vmatpush.bf16.msra.mxu0 %v374
    %440 = vmatpush.bf16.msra.mxu0 %v372
    %441 = vmatpush.bf16.msra.mxu0 %v370
    %442 = vmatmul.bf16.gmra.mxu0 %v234
    %v443 = vpop.f32.mrf.mxu0
    %v444 = vadd.f32 %v270, %v443
    %v445 = vpop.f32.mrf.mxu0
    %v446 = vadd.f32 %v270, %v445
    %447 = vdwg.mxu0
    %448 = vmatpush.bf16.msra.mxu0 %v400
    %449 = vmatpush.bf16.msra.mxu0 %v398
    %450 = vmatpush.bf16.msra.mxu0 %v396
    %451 = vmatpush.bf16.msra.mxu0 %v394
    %452 = vmatpush.bf16.msra.mxu0 %v392
    %453 = vmatpush.bf16.msra.mxu0 %v390
    %454 = vmatpush.bf16.msra.mxu0 %v388
    %455 = vmatpush.bf16.msra.mxu0 %v386
    %456 = vmatmul.bf16.gmra.mxu0 %v235
    %v457 = vpop.f32.mrf.mxu0
    %v458 = vadd.f32 %v444, %v457
    %v459 = vpop.f32.mrf.mxu0
    %v460 = vadd.f32 %v446, %v459
    %461 = vdwg.mxu0
    %462 = vmatpush.bf16.msra.mxu0 %v385
    %463 = vmatpush.bf16.msra.mxu0 %v383
    %464 = vmatpush.bf16.msra.mxu0 %v381
    %465 = vmatpush.bf16.msra.mxu0 %v379
    %466 = vmatpush.bf16.msra.mxu0 %v377
    %467 = vmatpush.bf16.msra.mxu0 %v375
    %468 = vmatpush.bf16.msra.mxu0 %v373
    %469 = vmatpush.bf16.msra.mxu0 %v371
    %470 = vmatmul.bf16.gmra.mxu0 %v234
    %v471 = vpop.f32.mrf.mxu0
    %v472 = vadd.f32 %v271, %v471
    %v473 = vpop.f32.mrf.mxu0
    %v474 = vadd.f32 %v271, %v473
    %475 = vdwg.mxu0
    %476 = vmatpush.bf16.msra.mxu0 %v401
    %477 = vmatpush.bf16.msra.mxu0 %v399
    %478 = vmatpush.bf16.msra.mxu0 %v397
    %479 = vmatpush.bf16.msra.mxu0 %v395
    %480 = vmatpush.bf16.msra.mxu0 %v393
    %481 = vmatpush.bf16.msra.mxu0 %v391
    %482 = vmatpush.bf16.msra.mxu0 %v389
    %483 = vmatpush.bf16.msra.mxu0 %v387
    %484 = vmatmul.bf16.gmra.mxu0 %v235
    %v485 = vpop.f32.mrf.mxu0
    %v486 = vadd.f32 %v472, %v485
    %v487 = vpop.f32.mrf.mxu0
    %v488 = vadd.f32 %v474, %v487
    %489 = vdwg.mxu0
    %v490 = vmax.f32 %v458, 0.0
    %v491 = vmax.f32 %v486, 0.0
    %v492 = vmax.f32 %v460, 0.0
    %v493 = vmax.f32 %v488, 0.0
    %v494 = vpack.c.bf16 %v492, %v490
    %v495 = vpack.c.bf16 %v493, %v491
    %v496 = vld [vmem:[#allocation10] sm:$0xf]
    %v497 = vld [vmem:[#allocation10 + $0x4] sm:$0xf]
    %v498 = vld [vmem:[#allocation10 + $0x8] sm:$0xf]
    %v499 = vld [vmem:[#allocation10 + $0xc] sm:$0xf]
    %v500 = vld [vmem:[#allocation10 + $0x10] sm:$0xf]
    %v501 = vld [vmem:[#allocation10 + $0x14] sm:$0xf]
    %v502 = vld [vmem:[#allocation10 + $0x18] sm:$0xf]
    %v503 = vld [vmem:[#allocation10 + $0x1c] sm:$0xf]
    %v504 = vld [vmem:[#allocation10 + $0x20] sm:$0xf]
    %v505 = vld [vmem:[#allocation10 + $0x24] sm:$0xf]
    %v506 = vld [vmem:[#allocation10 + $0x28] sm:$0xf]
    %v507 = vld [vmem:[#allocation10 + $0x2c] sm:$0xf]
    %v508 = vld [vmem:[#allocation10 + $0x30] sm:$0xf]
    %v509 = vld [vmem:[#allocation10 + $0x34] sm:$0xf]
    %v510 = vld [vmem:[#allocation10 + $0x38] sm:$0xf]
    %v511 = vld [vmem:[#allocation10 + $0x3c] sm:$0xf]
    %v512 = vld [vmem:[#allocation10 + $0x40] sm:$0xf]
    %v513 = vld [vmem:[#allocation10 + $0x44] sm:$0xf]
    %v514 = vld [vmem:[#allocation10 + $0x48] sm:$0xf]
    %v515 = vld [vmem:[#allocation10 + $0x4c] sm:$0xf]
    %v516 = vld [vmem:[#allocation10 + $0x50] sm:$0xf]
    %v517 = vld [vmem:[#allocation10 + $0x54] sm:$0xf]
    %v518 = vld [vmem:[#allocation10 + $0x58] sm:$0xf]
    %v519 = vld [vmem:[#allocation10 + $0x5c] sm:$0xf]
    %v520 = vld [vmem:[#allocation10 + $0x60] sm:$0xf]
    %v521 = vld [vmem:[#allocation10 + $0x64] sm:$0xf]
    %v522 = vld [vmem:[#allocation10 + $0x68] sm:$0xf]
    %v523 = vld [vmem:[#allocation10 + $0x6c] sm:$0xf]
    %v524 = vld [vmem:[#allocation10 + $0x70] sm:$0xf]
    %v525 = vld [vmem:[#allocation10 + $0x74] sm:$0xf]
    %v526 = vld [vmem:[#allocation10 + $0x78] sm:$0xf]
    %v527 = vld [vmem:[#allocation10 + $0x7c] sm:$0xf]
    %v528 = vld [vmem:[%s6] sm:$0x1]
    %v530 = vperm.slane %v528, 0
    %v564 = vunpack.c.l.b16 %v496
    %v565 = vunpack.c.l.b16 %v497
    %v566 = vunpack.c.l.b16 %v498
    %v567 = vunpack.c.l.b16 %v499
    %v568 = vunpack.c.l.b16 %v500
    %v569 = vunpack.c.l.b16 %v501
    %v570 = vunpack.c.l.b16 %v502
    %v571 = vunpack.c.l.b16 %v503
    %v572 = vunpack.c.l.b16 %v504
    %v573 = vunpack.c.l.b16 %v505
    %v574 = vunpack.c.l.b16 %v506
    %v575 = vunpack.c.l.b16 %v507
    %v576 = vunpack.c.l.b16 %v508
    %v577 = vunpack.c.l.b16 %v509
    %v578 = vunpack.c.l.b16 %v510
    %v579 = vunpack.c.l.b16 %v511
    %v580 = vunpack.c.l.b16 %v512
    %v581 = vunpack.c.l.b16 %v513
    %v582 = vunpack.c.l.b16 %v514
    %v583 = vunpack.c.l.b16 %v515
    %v584 = vunpack.c.l.b16 %v516
    %v585 = vunpack.c.l.b16 %v517
    %v586 = vunpack.c.l.b16 %v518
    %v587 = vunpack.c.l.b16 %v519
    %v588 = vunpack.c.l.b16 %v520
    %v589 = vunpack.c.l.b16 %v521
    %v590 = vunpack.c.l.b16 %v522
    %v591 = vunpack.c.l.b16 %v523
    %v592 = vunpack.c.l.b16 %v524
    %v593 = vunpack.c.l.b16 %v525
    %v594 = vunpack.c.l.b16 %v526
    %v595 = vunpack.c.l.b16 %v527
    %v596 = vpack.c.b16 %v565, %v564
    %v597 = vpack.c.b16 %v567, %v566
    %v598 = vpack.c.b16 %v569, %v568
    %v599 = vpack.c.b16 %v571, %v570
    %v600 = vpack.c.b16 %v573, %v572
    %v601 = vpack.c.b16 %v575, %v574
    %v602 = vpack.c.b16 %v577, %v576
    %v603 = vpack.c.b16 %v579, %v578
    %v604 = vpack.c.b16 %v581, %v580
    %v605 = vpack.c.b16 %v583, %v582
    %v606 = vpack.c.b16 %v585, %v584
    %v607 = vpack.c.b16 %v587, %v586
    %v608 = vpack.c.b16 %v589, %v588
    %v609 = vpack.c.b16 %v591, %v590
    %v610 = vpack.c.b16 %v593, %v592
    %v611 = vpack.c.b16 %v595, %v594
    %628 = vmatpush.bf16.msra.mxu0 %v603
    %629 = vmatpush.bf16.msra.mxu0 %v602
    %630 = vmatpush.bf16.msra.mxu0 %v601
    %631 = vmatpush.bf16.msra.mxu0 %v600
    %632 = vmatpush.bf16.msra.mxu0 %v599
    %633 = vmatpush.bf16.msra.mxu0 %v598
    %634 = vmatpush.bf16.msra.mxu0 %v597
    %635 = vmatpush.bf16.msra.mxu0 %v596
    %636 = vmatmul.bf16.gmra.mxu0 %v494
    %v637 = vpop.f32.mrf.mxu0
    %v638 = vadd.f32 %v530, %v637
    %v639 = vpop.f32.mrf.mxu0
    %v640 = vadd.f32 %v530, %v639
    %641 = vdwg.mxu0
    %642 = vmatpush.bf16.msra.mxu0 %v611
    %643 = vmatpush.bf16.msra.mxu0 %v610
    %644 = vmatpush.bf16.msra.mxu0 %v609
    %645 = vmatpush.bf16.msra.mxu0 %v608
    %646 = vmatpush.bf16.msra.mxu0 %v607
    %647 = vmatpush.bf16.msra.mxu0 %v606
    %648 = vmatpush.bf16.msra.mxu0 %v605
    %649 = vmatpush.bf16.msra.mxu0 %v604
    %650 = vmatmul.bf16.gmra.mxu0 %v495
    %v651 = vpop.f32.mrf.mxu0
    %v652 = vadd.f32 %v638, %v651
    %v653 = vpop.f32.mrf.mxu0
    %v654 = vadd.f32 %v640, %v653
    %655 = vdwg.mxu0
    %v656 = vtanh.pop %v652
    %v657 = vtanh.pop %v654
    %v658 = vadd.f32 %v656, 1.0
    %v659 = vadd.f32 %v657, 1.0
    %v660 = vmul.f32 %v658, 0.5
    %v661 = vmul.f32 %v659, 0.5
    %662 = vst [vmem:[#allocation11] sm:$0xff] %v660
    %663 = vst [vmem:[#allocation11 + $0x8] sm:$0xff] %v661
    // Predicated region
    $region50: #{tpu_custom_call.1} parent=1 // pred_check
      _
    $region51: #{tpu_custom_call.1} parent=1 // pred_check_branch
      %665 = sbr.rel (0) target = $region53
    $region52: #{tpu_custom_call.1} parent=1 // pred_region
      %667 = vsyncadd [#allocation4], 0
      %s668 = sshll.u32 [#allocation11], 4
      %s669 = int_to_ptr.vmem [resolvable:$true] %s668
      %s670 = sshll.u32 %s7, 4
      %s671 = int_to_ptr.hbm [resolvable:$true] %s670
      %676 = dma.vmem_to_hbm [thread:$0]  %s669, 256, %s671, [#allocation4], 128, 128, 8
    $region53: #{tpu_custom_call.1} parent=1 // pred_fallthru
      _
    // Predicated region
    $region54: #{tpu_custom_call.1} parent=1 // pred_check
      _
    $region55: #{tpu_custom_call.1} parent=1 // pred_check_branch
      %678 = sbr.rel (0) target = $region57
    $region56: #{tpu_custom_call.1} parent=1 // pred_region
      %680 = dma.done [#allocation4], 256
    $region57: #{tpu_custom_call.1} parent=1 // pred_fallthru
      _
    %681 = vsyncpa [#allocation3], 1
    %682 = vsyncpa [#allocation6], 1
    %683 = vsyncpa [#allocation9], 1
    %684 = vsyncpa [#allocation4], 1

</llo_original>
